<compile_context>
chip_gen: v6e
topology: v6e:2x2x1
jax: 0.10.0
libtpu: 0.0.40
codegen_flags: <defaults>
</compile_context>

<pallas_src>
import functools

import jax
import jax.numpy as jnp
from jax import lax
from jax.experimental import pallas as pl
from jax.experimental.pallas import tpu as pltpu


def _round_up(x, m):
    return ((x + m - 1) // m) * m


def _l2_normalize(x):
    """F.normalize(p=2, dim=1): x / max(||x||, 1e-12) == x * rsqrt(max(||x||^2, 1e-24))."""
    x = x.astype(jnp.float32)
    sq = jnp.sum(x * x, axis=1, keepdims=True)
    return x * lax.rsqrt(jnp.maximum(sq, 1e-24))


def _contrastive_loss_kernel(q1_ref, q2_ref, k1_ref, k2_ref,          # inputs (pre-normalized, bf16)
                             loss1_ref, loss2_ref,                    # outputs (f32 per-row losses)
                             denom1_ref, denom2_ref, pos_ref,         # VMEM scratch accumulators
                             *, batch_size, tile, temperature, pad_keys):
    """One (query-tile, key-tile) step of the InfoNCE loss.

    q1/q2: (tile, Dp) query rows of the two views (block depends on qi only)
    k1/k2: (tile, Dp) key rows of the two views   (block depends on ki only)
    loss1/loss2: (tile, 1) per-row losses for the two halves (written at last ki)
    denom1/denom2/pos: (tile, 1) f32 accumulators, live across the ki axis.
    """
    qi = pl.program_id(0)
    ki = pl.program_id(1)
    n_kt = pl.num_programs(1)
    inv_t = 1.0 / temperature
    on_diag = qi == ki          # the only key step containing diagonal / positive entries

    @pl.when(ki == 0)
    def _init():
        denom1_ref[...] = jnp.zeros_like(denom1_ref)
        denom2_ref[...] = jnp.zeros_like(denom2_ref)

    q1 = q1_ref[...]
    q2 = q2_ref[...]
    k1 = k1_ref[...]
    k2 = k2_ref[...]

    # MXU-native "A @ B.T": contract dim 1 of both operands, f32 accumulation.
    dn = (((1,), (1,)), ((), ()))

    def diag_mask():
        r = lax.broadcasted_iota(jnp.int32, (tile, tile), 0)
        c = lax.broadcasted_iota(jnp.int32, (tile, tile), 1)
        return r == c

    # Each similarity block is fully consumed before the next one is produced,
    # so at most one (tile, tile) f32 block is live at a time.

    # ---- block 11: q1 . k1^T (same half) ------------------------------------
    s = lax.dot_general(q1, k1, dn, preferred_element_type=jnp.float32)
    e = jnp.exp(s * inv_t)
    denom1_ref[...] += jnp.sum(e, axis=1, keepdims=True)

    @pl.when(on_diag)
    def _():  # remove the masked-out self-similarity term exp(sim(z1_i, z1_i)/T)
        denom1_ref[...] -= jnp.sum(jnp.where(diag_mask(), e, 0.0),
                                   axis=1, keepdims=True)

    # ---- block 12: q1 . k2^T (cross half; holds the positives) --------------
    s = lax.dot_general(q1, k2, dn, preferred_element_type=jnp.float32)
    e = jnp.exp(s * inv_t)
    denom1_ref[...] += jnp.sum(e, axis=1, keepdims=True)

    @pl.when(on_diag)
    def _():  # positive pair sim(z1_i, z2_i) is the diagonal of this block
        pos_ref[...] = jnp.sum(jnp.where(diag_mask(), s, 0.0),
                               axis=1, keepdims=True)

    # ---- block 21: q2 . k1^T (cross half) ------------------------------------
    s = lax.dot_general(q2, k1, dn, preferred_element_type=jnp.float32)
    e = jnp.exp(s * inv_t)
    denom2_ref[...] += jnp.sum(e, axis=1, keepdims=True)

    # ---- block 22: q2 . k2^T (same half) -------------------------------------
    s = lax.dot_general(q2, k2, dn, preferred_element_type=jnp.float32)
    e = jnp.exp(s * inv_t)
    denom2_ref[...] += jnp.sum(e, axis=1, keepdims=True)

    @pl.when(on_diag)
    def _():
        denom2_ref[...] -= jnp.sum(jnp.where(diag_mask(), e, 0.0),
                                   axis=1, keepdims=True)

    @pl.when(ki == n_kt - 1)
    def _finalize():
        d1 = denom1_ref[...]
        d2 = denom2_ref[...]
        if pad_keys:  # zero-padded keys each contributed exp(0)=1 to both halves
            d1 = d1 - jnp.float32(2.0 * pad_keys)
            d2 = d2 - jnp.float32(2.0 * pad_keys)
        pos_over_t = pos_ref[...] * inv_t
        # -log(exp(pos/T) / denom) == log(denom) - pos/T   (log domain, no divide)
        # TODO(synk): matches the PyTorch reference's un-stabilized exp; very small
        # temperatures would need an online-max (flash) stabilization.
        loss1 = jnp.log(d1) - pos_over_t
        loss2 = jnp.log(d2) - pos_over_t
        if pad_keys:
            row_valid = (qi * tile +
                         lax.broadcasted_iota(jnp.int32, (tile, 1), 0)) < batch_size
            loss1 = jnp.where(row_valid, loss1, 0.0)
            loss2 = jnp.where(row_valid, loss2, 0.0)
        loss1_ref[...] = loss1
        loss2_ref[...] = loss2


def contrastive_loss(proj_1, proj_2, temperature=0.5, *, tile=256,
                     compute_dtype=jnp.bfloat16):
    """proj_1, proj_2: [batch, embedding_dim] -> scalar SimCLR InfoNCE loss."""
    assert proj_1.shape == proj_2.shape and proj_1.ndim == 2
    B, D = proj_1.shape

    # Normalize ONCE in f32 and feed the MXU bf16 operands.
    z1 = _l2_normalize(proj_1).astype(compute_dtype)
    z2 = _l2_normalize(proj_2).astype(compute_dtype)

    Dp = _round_up(max(D, 128), 128)                 # lane-dense embedding dim
    itemsize = jnp.dtype(compute_dtype).itemsize

    # ---- tile selection -------------------------------------------------------
    tile = max(8, _round_up(min(int(tile), 1024), 8))
    # Keep double-buffered input blocks + live f32 work inside the smallest VMEM
    # budget (v7x: 64 MiB physical / 32 MiB default scoped).
    while tile > 8 and (8 * tile * Dp * itemsize + 6 * tile * tile * 4) > 24 * 1024 * 1024:
        tile = max(8, _round_up(tile // 2, 8))

    pB8 = _round_up(B, 8)
    n_t = -(-pB8 // tile)
    if n_t == 1 and pB8 >= 256:
        n_t = 2                                       # >= 2 query tiles: both v7x TCs get work
    tile = _round_up(-(-pB8 // n_t), 8)               # balance tiles, minimize padding
    pB = n_t * tile
    pad_keys = pB - B

    if pB != B or Dp != D:
        pad = ((0, pB - B), (0, Dp - D))
        z1 = jnp.pad(z1, pad)
        z2 = jnp.pad(z2, pad)

    kernel = functools.partial(
        _contrastive_loss_kernel,
        batch_size=B, tile=tile, temperature=float(temperature), pad_keys=pad_keys)

    q_spec = pl.BlockSpec((tile, Dp), lambda qi, ki: (qi, 0))
    k_spec = pl.BlockSpec((tile, Dp), lambda qi, ki: (ki, 0))
    o_spec = pl.BlockSpec((tile, 1), lambda qi, ki: (qi, 0))

    vmem_limit = int(min(max(8 * tile * Dp * itemsize      # 4 inputs x 2 buffers
                             + 6 * tile * tile * 4         # live f32 work blocks
                             + 4 * tile * 4                # output blocks
                             + 3 * tile * 4                # scratch accumulators
                             + (2 << 20),                  # headroom
                             16 << 20),
                         48 << 20))

    loss1, loss2 = pl.pallas_call(
        kernel,
        out_shape=(jax.ShapeDtypeStruct((pB, 1), jnp.float32),
                   jax.ShapeDtypeStruct((pB, 1), jnp.float32)),
        grid_spec=pltpu.PrefetchScalarGridSpec(
            num_scalar_prefetch=0,
            grid=(n_t, n_t),
            in_specs=[q_spec, q_spec, k_spec, k_spec],
            out_specs=(o_spec, o_spec),
            scratch_shapes=[pltpu.VMEM((tile, 1), jnp.float32)] * 3,
        ),
        compiler_params=pltpu.CompilerParams(
            dimension_semantics=("parallel", "arbitrary"),
            vmem_limit_bytes=vmem_limit),
    )(z1, z2, z1, z2)

    return (jnp.sum(loss1) + jnp.sum(loss2)) / (2.0 * B)


# ----------------------------- reference / tests -------------------------------

def _reference_loss_from_normalized(z1, z2, temperature):
    """PyTorch ContrastiveLoss forward, given already-normalized embeddings."""
    b = z1.shape[0]
    n = 2 * b
    z = jnp.concatenate([z1, z2], axis=0)
    sim = z @ z.T
    mask = 1.0 - jnp.eye(n, dtype=jnp.float32)
    pos = jnp.concatenate([jnp.diagonal(sim, b), jnp.diagonal(sim, -b)])
    denom = jnp.sum(mask * jnp.exp(sim / temperature), axis=1)
    return jnp.sum(-jnp.log(jnp.exp(pos / temperature) / denom)) / (2.0 * b)


def _reference_loss(p1, p2, temperature):
    """Pure-JAX (f32) mirror of the PyTorch ContrastiveLoss forward."""
    z1 = p1 / jnp.maximum(jnp.linalg.norm(p1, axis=1, keepdims=True), 1e-12)
    z2 = p2 / jnp.maximum(jnp.linalg.norm(p2, axis=1, keepdims=True), 1e-12)
    return _reference_loss_from_normalized(z1, z2, temperature)


if __name__ == "__main__":
    key = jax.random.PRNGKey(0)
    T = 0.5

    def check(p1, p2, **kw):
        loss = contrastive_loss(p1, p2, temperature=T, **kw)
        jax.block_until_ready(loss)
        # Matched reference: same pre-normalized bf16 operands the kernel sees.
        z1 = _l2_normalize(p1).astype(jnp.bfloat16).astype(jnp.float32)
        z2 = _l2_normalize(p2).astype(jnp.bfloat16).astype(jnp.float32)
        ref_m = _reference_loss_from_normalized(z1, z2, T)
        assert jnp.allclose(loss, ref_m, rtol=1e-3, atol=1e-3), (loss, ref_m)
        # Full-f32 reference: looser tolerance (bf16 operand quantization).
        ref_f = _reference_loss(p1, p2, T)
        assert jnp.allclose(loss, ref_f, rtol=3e-2, atol=3e-2), (loss, ref_f)

    # Case 1: module-sized example (batch=8, embedding_dim=32), single tile.
    k1, k2 = jax.random.split(key)
    check(jax.random.normal(k1, (8, 32), jnp.float32),
          jax.random.normal(k2, (8, 32), jnp.float32))

    # Case 2: batch not a multiple of 8 -> exercises padded-key correction.
    k3, k4 = jax.random.split(k1)
    check(jax.random.normal(k3, (20, 32), jnp.float32),
          jax.random.normal(k4, (20, 32), jnp.float32))

    # Case 3: small tile -> exercises the multi-tile (3x3 grid) accumulation path.
    k5, k6 = jax.random.split(k2)
    check(jax.random.normal(k5, (40, 96), jnp.float32),
          jax.random.normal(k6, (40, 96), jnp.float32), tile=16)

    print("KERNEL_OK")
</pallas_src>

<mosaic_0001>
module attributes {stable_mosaic.version = 11 : i64} {
  func.func @_contrastive_loss_kernel(%arg0: i32, %arg1: i32, %arg2: memref<8x128xbf16, #tpu.memory_space<vmem>>, %arg3: memref<8x128xbf16, #tpu.memory_space<vmem>>, %arg4: memref<8x128xbf16, #tpu.memory_space<vmem>>, %arg5: memref<8x128xbf16, #tpu.memory_space<vmem>>, %arg6: memref<8x1xf32, #tpu.memory_space<vmem>>, %arg7: memref<8x1xf32, #tpu.memory_space<vmem>>, %arg8: memref<8x1xf32, #tpu.memory_space<vmem>>, %arg9: memref<8x1xf32, #tpu.memory_space<vmem>>, %arg10: memref<8x1xf32, #tpu.memory_space<vmem>>) attributes {dimension_semantics = [#tpu.dimension_semantics<parallel>, #tpu.dimension_semantics<arbitrary>], iteration_bounds = array<i64: 1, 1>, scalar_prefetch = 0 : i64, scratch_operands = 3 : i64, tpu.core_type = #tpu.core_type<tc>, window_params = [{transform_indices = @transform_0, window_bounds = array<i64: 8, 128>}, {transform_indices = @transform_1, window_bounds = array<i64: 8, 128>}, {transform_indices = @transform_2, window_bounds = array<i64: 8, 128>}, {transform_indices = @transform_3, window_bounds = array<i64: 8, 128>}, {transform_indices = @transform_4, window_bounds = array<i64: 8, 1>}, {transform_indices = @transform_5, window_bounds = array<i64: 8, 1>}]} {
    %0 = arith.cmpi eq, %arg0, %arg1 : i32
    %c0_i32 = arith.constant 0 : i32
    %1 = arith.cmpi eq, %arg1, %c0_i32 : i32
    %2 = arith.extui %1 : i1 to i32
    %c0_i32_0 = arith.constant 0 : i32
    %3 = arith.cmpi ne, %2, %c0_i32_0 : i32
    scf.if %3 {
      %cst_40 = arith.constant 0.000000e+00 : f32
      %53 = vector.broadcast %cst_40 : f32 to vector<8x1xf32>
      %c0_41 = arith.constant 0 : index
      %c0_42 = arith.constant 0 : index
      %54 = vector.load %arg8[%c0_41, %c0_42] : memref<8x1xf32, #tpu.memory_space<vmem>>, vector<8x1xf32>
      tpu.vector_store %arg8[%c0_41, %c0_42], %53 {strides = array<i32>} : memref<8x1xf32, #tpu.memory_space<vmem>>, vector<8x1xf32>,
      %cst_43 = arith.constant 0.000000e+00 : f32
      %55 = vector.broadcast %cst_43 : f32 to vector<8x1xf32>
      %c0_44 = arith.constant 0 : index
      %c0_45 = arith.constant 0 : index
      %56 = vector.load %arg9[%c0_44, %c0_45] : memref<8x1xf32, #tpu.memory_space<vmem>>, vector<8x1xf32>
      tpu.vector_store %arg9[%c0_44, %c0_45], %55 {strides = array<i32>} : memref<8x1xf32, #tpu.memory_space<vmem>>, vector<8x1xf32>,
    } else {
    }
    %c0 = arith.constant 0 : index
    %c0_1 = arith.constant 0 : index
    %4 = vector.load %arg2[%c0, %c0_1] : memref<8x128xbf16, #tpu.memory_space<vmem>>, vector<8x128xbf16>
    %c0_2 = arith.constant 0 : index
    %c0_3 = arith.constant 0 : index
    %5 = vector.load %arg3[%c0_2, %c0_3] : memref<8x128xbf16, #tpu.memory_space<vmem>>, vector<8x128xbf16>
    %c0_4 = arith.constant 0 : index
    %c0_5 = arith.constant 0 : index
    %6 = vector.load %arg4[%c0_4, %c0_5] : memref<8x128xbf16, #tpu.memory_space<vmem>>, vector<8x128xbf16>
    %c0_6 = arith.constant 0 : index
    %c0_7 = arith.constant 0 : index
    %7 = vector.load %arg5[%c0_6, %c0_7] : memref<8x128xbf16, #tpu.memory_space<vmem>>, vector<8x128xbf16>
    %cst = arith.constant dense<0.000000e+00> : vector<8x8xf32>
    %8 = tpu.matmul %4, %6, %cst {dimension_numbers = #tpu.dot_dimension_numbers<[1], [1], [0], [0], [0, 0, 1, 0], [], []>} : vector<8x128xbf16>, vector<8x128xbf16>, vector<8x8xf32> -> vector<8x8xf32>
    %cst_8 = arith.constant 2.000000e+00 : f32
    %9 = vector.broadcast %cst_8 : f32 to vector<8x8xf32>
    %10 = arith.mulf %8, %9 : vector<8x8xf32>
    %11 = math.exp %10 : vector<8x8xf32>
    %c0_9 = arith.constant 0 : index
    %c0_10 = arith.constant 0 : index
    %12 = vector.load %arg8[%c0_9, %c0_10] : memref<8x1xf32, #tpu.memory_space<vmem>>, vector<8x1xf32>
    %cst_11 = arith.constant dense<0.000000e+00> : vector<8xf32>
    %13 = vector.multi_reduction <add>, %11, %cst_11 [1] : vector<8x8xf32> to vector<8xf32>
    %14 = vector.shape_cast %13 : vector<8xf32> to vector<8x1xf32>
    %15 = arith.addf %12, %14 : vector<8x1xf32>
    %c0_12 = arith.constant 0 : index
    %c0_13 = arith.constant 0 : index
    %16 = vector.load %arg8[%c0_12, %c0_13] : memref<8x1xf32, #tpu.memory_space<vmem>>, vector<8x1xf32>
    tpu.vector_store %arg8[%c0_12, %c0_13], %15 {strides = array<i32>} : memref<8x1xf32, #tpu.memory_space<vmem>>, vector<8x1xf32>,
    %17 = arith.extui %0 : i1 to i32
    %c0_i32_14 = arith.constant 0 : i32
    %18 = arith.cmpi ne, %17, %c0_i32_14 : i32
    scf.if %18 {
      %c0_40 = arith.constant 0 : index
      %c0_41 = arith.constant 0 : index
      %53 = vector.load %arg8[%c0_40, %c0_41] : memref<8x1xf32, #tpu.memory_space<vmem>>, vector<8x1xf32>
      %54 = tpu.iota {dimensions = array<i32: 0>} : vector<8x8xi32>
      %55 = tpu.iota {dimensions = array<i32: 1>} : vector<8x8xi32>
      %56 = arith.cmpi eq, %54, %55 : vector<8x8xi32>
      %cst_42 = arith.constant 0.000000e+00 : f32
      %57 = vector.broadcast %cst_42 : f32 to vector<8x8xf32>
      %58 = arith.select %56, %11, %57 : vector<8x8xi1>, vector<8x8xf32>
      %cst_43 = arith.constant dense<0.000000e+00> : vector<8xf32>
      %59 = vector.multi_reduction <add>, %58, %cst_43 [1] : vector<8x8xf32> to vector<8xf32>
      %60 = vector.shape_cast %59 : vector<8xf32> to vector<8x1xf32>
      %61 = arith.subf %53, %60 : vector<8x1xf32>
      %c0_44 = arith.constant 0 : index
      %c0_45 = arith.constant 0 : index
      %62 = vector.load %arg8[%c0_44, %c0_45] : memref<8x1xf32, #tpu.memory_space<vmem>>, vector<8x1xf32>
      tpu.vector_store %arg8[%c0_44, %c0_45], %61 {strides = array<i32>} : memref<8x1xf32, #tpu.memory_space<vmem>>, vector<8x1xf32>,
    } else {
    }
    %cst_15 = arith.constant dense<0.000000e+00> : vector<8x8xf32>
    %19 = tpu.matmul %4, %7, %cst_15 {dimension_numbers = #tpu.dot_dimension_numbers<[1], [1], [0], [0], [0, 0, 1, 0], [], []>} : vector<8x128xbf16>, vector<8x128xbf16>, vector<8x8xf32> -> vector<8x8xf32>
    %cst_16 = arith.constant 2.000000e+00 : f32
    %20 = vector.broadcast %cst_16 : f32 to vector<8x8xf32>
    %21 = arith.mulf %19, %20 : vector<8x8xf32>
    %22 = math.exp %21 : vector<8x8xf32>
    %c0_17 = arith.constant 0 : index
    %c0_18 = arith.constant 0 : index
    %23 = vector.load %arg8[%c0_17, %c0_18] : memref<8x1xf32, #tpu.memory_space<vmem>>, vector<8x1xf32>
    %cst_19 = arith.constant dense<0.000000e+00> : vector<8xf32>
    %24 = vector.multi_reduction <add>, %22, %cst_19 [1] : vector<8x8xf32> to vector<8xf32>
    %25 = vector.shape_cast %24 : vector<8xf32> to vector<8x1xf32>
    %26 = arith.addf %23, %25 : vector<8x1xf32>
    %c0_20 = arith.constant 0 : index
    %c0_21 = arith.constant 0 : index
    %27 = vector.load %arg8[%c0_20, %c0_21] : memref<8x1xf32, #tpu.memory_space<vmem>>, vector<8x1xf32>
    tpu.vector_store %arg8[%c0_20, %c0_21], %26 {strides = array<i32>} : memref<8x1xf32, #tpu.memory_space<vmem>>, vector<8x1xf32>,
    %28 = arith.extui %0 : i1 to i32
    %c0_i32_22 = arith.constant 0 : i32
    %29 = arith.cmpi ne, %28, %c0_i32_22 : i32
    scf.if %29 {
      %53 = tpu.iota {dimensions = array<i32: 0>} : vector<8x8xi32>
      %54 = tpu.iota {dimensions = array<i32: 1>} : vector<8x8xi32>
      %55 = arith.cmpi eq, %53, %54 : vector<8x8xi32>
      %cst_40 = arith.constant 0.000000e+00 : f32
      %56 = vector.broadcast %cst_40 : f32 to vector<8x8xf32>
      %57 = arith.select %55, %19, %56 : vector<8x8xi1>, vector<8x8xf32>
      %cst_41 = arith.constant dense<0.000000e+00> : vector<8xf32>
      %58 = vector.multi_reduction <add>, %57, %cst_41 [1] : vector<8x8xf32> to vector<8xf32>
      %59 = vector.shape_cast %58 : vector<8xf32> to vector<8x1xf32>
      %c0_42 = arith.constant 0 : index
      %c0_43 = arith.constant 0 : index
      %60 = vector.load %arg10[%c0_42, %c0_43] : memref<8x1xf32, #tpu.memory_space<vmem>>, vector<8x1xf32>
      tpu.vector_store %arg10[%c0_42, %c0_43], %59 {strides = array<i32>} : memref<8x1xf32, #tpu.memory_space<vmem>>, vector<8x1xf32>,
    } else {
    }
    %cst_23 = arith.constant dense<0.000000e+00> : vector<8x8xf32>
    %30 = tpu.matmul %5, %6, %cst_23 {dimension_numbers = #tpu.dot_dimension_numbers<[1], [1], [0], [0], [0, 0, 1, 0], [], []>} : vector<8x128xbf16>, vector<8x128xbf16>, vector<8x8xf32> -> vector<8x8xf32>
    %cst_24 = arith.constant 2.000000e+00 : f32
    %31 = vector.broadcast %cst_24 : f32 to vector<8x8xf32>
    %32 = arith.mulf %30, %31 : vector<8x8xf32>
    %33 = math.exp %32 : vector<8x8xf32>
    %c0_25 = arith.constant 0 : index
    %c0_26 = arith.constant 0 : index
    %34 = vector.load %arg9[%c0_25, %c0_26] : memref<8x1xf32, #tpu.memory_space<vmem>>, vector<8x1xf32>
    %cst_27 = arith.constant dense<0.000000e+00> : vector<8xf32>
    %35 = vector.multi_reduction <add>, %33, %cst_27 [1] : vector<8x8xf32> to vector<8xf32>
    %36 = vector.shape_cast %35 : vector<8xf32> to vector<8x1xf32>
    %37 = arith.addf %34, %36 : vector<8x1xf32>
    %c0_28 = arith.constant 0 : index
    %c0_29 = arith.constant 0 : index
    %38 = vector.load %arg9[%c0_28, %c0_29] : memref<8x1xf32, #tpu.memory_space<vmem>>, vector<8x1xf32>
    tpu.vector_store %arg9[%c0_28, %c0_29], %37 {strides = array<i32>} : memref<8x1xf32, #tpu.memory_space<vmem>>, vector<8x1xf32>,
    %cst_30 = arith.constant dense<0.000000e+00> : vector<8x8xf32>
    %39 = tpu.matmul %5, %7, %cst_30 {dimension_numbers = #tpu.dot_dimension_numbers<[1], [1], [0], [0], [0, 0, 1, 0], [], []>} : vector<8x128xbf16>, vector<8x128xbf16>, vector<8x8xf32> -> vector<8x8xf32>
    %cst_31 = arith.constant 2.000000e+00 : f32
    %40 = vector.broadcast %cst_31 : f32 to vector<8x8xf32>
    %41 = arith.mulf %39, %40 : vector<8x8xf32>
    %42 = math.exp %41 : vector<8x8xf32>
    %c0_32 = arith.constant 0 : index
    %c0_33 = arith.constant 0 : index
    %43 = vector.load %arg9[%c0_32, %c0_33] : memref<8x1xf32, #tpu.memory_space<vmem>>, vector<8x1xf32>
    %cst_34 = arith.constant dense<0.000000e+00> : vector<8xf32>
    %44 = vector.multi_reduction <add>, %42, %cst_34 [1] : vector<8x8xf32> to vector<8xf32>
    %45 = vector.shape_cast %44 : vector<8xf32> to vector<8x1xf32>
    %46 = arith.addf %43, %45 : vector<8x1xf32>
    %c0_35 = arith.constant 0 : index
    %c0_36 = arith.constant 0 : index
    %47 = vector.load %arg9[%c0_35, %c0_36] : memref<8x1xf32, #tpu.memory_space<vmem>>, vector<8x1xf32>
    tpu.vector_store %arg9[%c0_35, %c0_36], %46 {strides = array<i32>} : memref<8x1xf32, #tpu.memory_space<vmem>>, vector<8x1xf32>,
    %48 = arith.extui %0 : i1 to i32
    %c0_i32_37 = arith.constant 0 : i32
    %49 = arith.cmpi ne, %48, %c0_i32_37 : i32
    scf.if %49 {
      %c0_40 = arith.constant 0 : index
      %c0_41 = arith.constant 0 : index
      %53 = vector.load %arg9[%c0_40, %c0_41] : memref<8x1xf32, #tpu.memory_space<vmem>>, vector<8x1xf32>
      %54 = tpu.iota {dimensions = array<i32: 0>} : vector<8x8xi32>
      %55 = tpu.iota {dimensions = array<i32: 1>} : vector<8x8xi32>
      %56 = arith.cmpi eq, %54, %55 : vector<8x8xi32>
      %cst_42 = arith.constant 0.000000e+00 : f32
      %57 = vector.broadcast %cst_42 : f32 to vector<8x8xf32>
      %58 = arith.select %56, %42, %57 : vector<8x8xi1>, vector<8x8xf32>
      %cst_43 = arith.constant dense<0.000000e+00> : vector<8xf32>
      %59 = vector.multi_reduction <add>, %58, %cst_43 [1] : vector<8x8xf32> to vector<8xf32>
      %60 = vector.shape_cast %59 : vector<8xf32> to vector<8x1xf32>
      %61 = arith.subf %53, %60 : vector<8x1xf32>
      %c0_44 = arith.constant 0 : index
      %c0_45 = arith.constant 0 : index
      %62 = vector.load %arg9[%c0_44, %c0_45] : memref<8x1xf32, #tpu.memory_space<vmem>>, vector<8x1xf32>
      tpu.vector_store %arg9[%c0_44, %c0_45], %61 {strides = array<i32>} : memref<8x1xf32, #tpu.memory_space<vmem>>, vector<8x1xf32>,
    } else {
    }
    %c0_i32_38 = arith.constant 0 : i32
    %50 = arith.cmpi eq, %arg1, %c0_i32_38 : i32
    %51 = arith.extui %50 : i1 to i32
    %c0_i32_39 = arith.constant 0 : i32
    %52 = arith.cmpi ne, %51, %c0_i32_39 : i32
    scf.if %52 {
      %c0_40 = arith.constant 0 : index
      %c0_41 = arith.constant 0 : index
      %53 = vector.load %arg8[%c0_40, %c0_41] : memref<8x1xf32, #tpu.memory_space<vmem>>, vector<8x1xf32>
      %c0_42 = arith.constant 0 : index
      %c0_43 = arith.constant 0 : index
      %54 = vector.load %arg9[%c0_42, %c0_43] : memref<8x1xf32, #tpu.memory_space<vmem>>, vector<8x1xf32>
      %c0_44 = arith.constant 0 : index
      %c0_45 = arith.constant 0 : index
      %55 = vector.load %arg10[%c0_44, %c0_45] : memref<8x1xf32, #tpu.memory_space<vmem>>, vector<8x1xf32>
      %cst_46 = arith.constant 2.000000e+00 : f32
      %56 = vector.broadcast %cst_46 : f32 to vector<8x1xf32>
      %57 = arith.mulf %55, %56 : vector<8x1xf32>
      %58 = math.log %53 : vector<8x1xf32>
      %59 = arith.subf %58, %57 : vector<8x1xf32>
      %60 = math.log %54 : vector<8x1xf32>
      %61 = arith.subf %60, %57 : vector<8x1xf32>
      %c0_47 = arith.constant 0 : index
      %c0_48 = arith.constant 0 : index
      %62 = vector.load %arg6[%c0_47, %c0_48] : memref<8x1xf32, #tpu.memory_space<vmem>>, vector<8x1xf32>
      tpu.vector_store %arg6[%c0_47, %c0_48], %59 {strides = array<i32>} : memref<8x1xf32, #tpu.memory_space<vmem>>, vector<8x1xf32>,
      %c0_49 = arith.constant 0 : index
      %c0_50 = arith.constant 0 : index
      %63 = vector.load %arg7[%c0_49, %c0_50] : memref<8x1xf32, #tpu.memory_space<vmem>>, vector<8x1xf32>
      tpu.vector_store %arg7[%c0_49, %c0_50], %61 {strides = array<i32>} : memref<8x1xf32, #tpu.memory_space<vmem>>, vector<8x1xf32>,
    } else {
    }
    return
  }
  func.func @transform_0(%arg0: i32, %arg1: i32) -> (i32, i32) {
    %c0_i32 = arith.constant 0 : i32
    %c0_i32_0 = arith.constant 0 : i32
    return %arg0, %c0_i32 : i32, i32
  }
  func.func @transform_1(%arg0: i32, %arg1: i32) -> (i32, i32) {
    %c0_i32 = arith.constant 0 : i32
    %c0_i32_0 = arith.constant 0 : i32
    return %arg0, %c0_i32 : i32, i32
  }
  func.func @transform_2(%arg0: i32, %arg1: i32) -> (i32, i32) {
    %c0_i32 = arith.constant 0 : i32
    %c0_i32_0 = arith.constant 0 : i32
    return %arg1, %c0_i32 : i32, i32
  }
  func.func @transform_3(%arg0: i32, %arg1: i32) -> (i32, i32) {
    %c0_i32 = arith.constant 0 : i32
    %c0_i32_0 = arith.constant 0 : i32
    return %arg1, %c0_i32 : i32, i32
  }
  func.func @transform_4(%arg0: i32, %arg1: i32) -> (i32, i32) {
    %c0_i32 = arith.constant 0 : i32
    %c0_i32_0 = arith.constant 0 : i32
    return %arg0, %c0_i32 : i32, i32
  }
  func.func @transform_5(%arg0: i32, %arg1: i32) -> (i32, i32) {
    %c0_i32 = arith.constant 0 : i32
    %c0_i32_0 = arith.constant 0 : i32
    return %arg0, %c0_i32 : i32, i32
  }
}

</mosaic_0001>

<llo_original>
// kernel: tpu_custom_call.1
$region0: #{tpu_custom_call.1}
  #allocation0 [shape = 'u32[]', space=smem, size = 0x4, offset = 0x4, fixed_abs, tag = 'smem constant byte address 0x4 - core index']
  #allocation1 [shape = 'u32[144,128]{1,0:T(1,128)}', space=vmem, size = 0x12000, scoped, tag = 'internal scratch']
  #allocation2 [shape = 'f32[8,1]{1,0:T(8,128)}', space=vmem, size = 0x1000, scoped, tag = 'scratch operand']
  #allocation3 [shape = 'f32[8,1]{1,0:T(8,128)}', space=vmem, size = 0x1000, scoped, tag = 'scratch operand']
  #allocation4 [shape = 'f32[8,1]{1,0:T(8,128)}', space=vmem, size = 0x1000, scoped, tag = 'scratch operand']
  %s0 = inlined_call_operand.hbm [shape: bf16[8,128], index: 0, kind: input, shape index: {}]
  %s1 = inlined_call_operand.hbm [shape: bf16[8,128], index: 1, kind: input, shape index: {}]
  %s2 = inlined_call_operand.hbm [shape: bf16[8,128], index: 2, kind: input, shape index: {}]
  %s3 = inlined_call_operand.vmem [shape: bf16[8,128], index: 3, kind: input, shape index: {}]
  %s4 = inlined_call_operand.vmem [shape: f32[8,1], index: 4, kind: output, shape index: {0}]
  %s5 = inlined_call_operand.vmem [shape: f32[8,1], index: 5, kind: output, shape index: {1}]
  %6 = xla_tuple %s4, %s5
  %s7 = sld [smem:[#allocation0]]
  $region66: #{tpu_custom_call.1} parent=0
    _
  %s9 = ssub.s32 1, %s7
  %s10 = scalar_select 0, %s9, %s7
  $region1: #{tpu_custom_call.1} parent=0
    #allocation5 [shape = 'u8[2048]{0}', space=vmem, size = 0x800, scoped, tag = 'input window, operand 0, single buffered']
    #allocation6 [shape = 's32[1]{0}', space=sflag, size = 0x4, scoped, tag = 'scoped memory for tpu_custom_call.1']
    #allocation7 [shape = 'u8[2048]{0}', space=vmem, size = 0x800, scoped, tag = 'input window, operand 1, single buffered']
    #allocation8 [shape = 's32[1]{0}', space=sflag, size = 0x4, scoped, tag = 'scoped memory for tpu_custom_call.1']
    #allocation9 [shape = 'u8[2048]{0}', space=vmem, size = 0x800, scoped, tag = 'input window, operand 2, single buffered']
    %11 = vsyncpa [#allocation6], 0
    %12 = vsyncpa [#allocation8], 0
    // Predicated region
    $region2: #{tpu_custom_call.1} parent=1 // pred_check
      _
    $region3: #{tpu_custom_call.1} parent=1 // pred_check_branch
      %14 = sbr.rel (0) target = $region5
    $region4: #{tpu_custom_call.1} parent=1 // pred_region
      %s16 = ssub.s32 64, 64
      %17 = vsyncadd [#allocation6], %s16
      %s19 = sshll.u32 [#allocation5], 4
      %s20 = int_to_ptr.vmem [resolvable:$true] %s19
      %22 = dma.hbm_to_vmem [thread:$0]  %s0, 64, %s20, [#allocation6]
    $region5: #{tpu_custom_call.1} parent=1 // pred_fallthru
      _
    // Predicated region
    $region6: #{tpu_custom_call.1} parent=1 // pred_check
      _
    $region7: #{tpu_custom_call.1} parent=1 // pred_check_branch
      %24 = sbr.rel (0) target = $region9
    $region8: #{tpu_custom_call.1} parent=1 // pred_region
      %s26 = ssub.s32 64, 64
      %27 = vsyncadd [#allocation8], %s26
      %s29 = sshll.u32 [#allocation7], 4
      %s30 = int_to_ptr.vmem [resolvable:$true] %s29
      %32 = dma.hbm_to_vmem [thread:$0]  %s1, 64, %s30, [#allocation8]
    $region9: #{tpu_custom_call.1} parent=1 // pred_fallthru
      _
    // Predicated region
    $region10: #{tpu_custom_call.1} parent=1 // pred_check
      _
    $region11: #{tpu_custom_call.1} parent=1 // pred_check_branch
      %34 = sbr.rel (0) target = $region13
    $region12: #{tpu_custom_call.1} parent=1 // pred_region
      %s36 = ssub.s32 64, 64
      %37 = vsyncadd [#allocation8], %s36
      %s39 = sshll.u32 [#allocation9], 4
      %s40 = int_to_ptr.vmem [resolvable:$true] %s39
      %42 = dma.hbm_to_vmem [thread:$0]  %s2, 64, %s40, [#allocation8]
    $region13: #{tpu_custom_call.1} parent=1 // pred_fallthru
      _
    // Predicated region
    $region14: #{tpu_custom_call.1} parent=1 // pred_check
      _
    $region15: #{tpu_custom_call.1} parent=1 // pred_check_branch
      %44 = sbr.rel (0) target = $region17
    $region16: #{tpu_custom_call.1} parent=1 // pred_region
      _
    $region17: #{tpu_custom_call.1} parent=1 // pred_fallthru
      _
    // Predicated region
    $region18: #{tpu_custom_call.1} parent=1 // pred_check
      _
    $region19: #{tpu_custom_call.1} parent=1 // pred_check_branch
      %46 = sbr.rel (0) target = $region21
    $region20: #{tpu_custom_call.1} parent=1 // pred_region
      %47 = dma.done [#allocation6], 64
    $region21: #{tpu_custom_call.1} parent=1 // pred_fallthru
      _
    // Predicated region
    $region22: #{tpu_custom_call.1} parent=1 // pred_check
      _
    $region23: #{tpu_custom_call.1} parent=1 // pred_check_branch
      %49 = sbr.rel (0) target = $region25
    $region24: #{tpu_custom_call.1} parent=1 // pred_region
      %50 = dma.done [#allocation8], 64
    $region25: #{tpu_custom_call.1} parent=1 // pred_fallthru
      _
    // Predicated region
    $region26: #{tpu_custom_call.1} parent=1 // pred_check
      _
    $region27: #{tpu_custom_call.1} parent=1 // pred_check_branch
      %52 = sbr.rel (0) target = $region29
    $region28: #{tpu_custom_call.1} parent=1 // pred_region
      %53 = dma.done [#allocation8], 64
    $region29: #{tpu_custom_call.1} parent=1 // pred_fallthru
      _
    %p55 = scmp.eq.s32.totalorder 0, 0
    %p56 = scmp.eq.s32.totalorder 0, 0
    // Predicated region
    $region30: #{tpu_custom_call.1} parent=1 // pred_check
      %p57 = pneg %p56
    $region31: #{tpu_custom_call.1} parent=1 // pred_check_branch
      %59 = sbr.rel (%p57) target = $region33
    $region32: #{tpu_custom_call.1} parent=1 // pred_region
      %vm60 = vcmask 7168
      %61 = vst.msk [vmem:[#allocation2] sm:$0xff] %vm60, 0.0
      %62 = vst.msk [vmem:[#allocation3] sm:$0xff] %vm60, 0.0
    $region33: #{tpu_custom_call.1} parent=1 // pred_fallthru
      _
    %v63 = vld [vmem:[#allocation5] sm:$0xf]
    %v64 = vld [vmem:[#allocation7] sm:$0xf]
    %v65 = vld [vmem:[#allocation9] sm:$0xf]
    %v66 = vld [vmem:[%s3] sm:$0xf]
    %67 = vmatprep.subr.bf16.mxu0 0
    %68 = vmatpush1.bf16.xpose.msra.mxu0 0
    %69 = vmatprep.subr.bf16.mxu0 0
    %70 = vmatpush1.bf16.xpose.msra.mxu0 0
    %71 = vmatprep.subr.bf16.mxu0 0
    %72 = vmatpush1.bf16.xpose.msra.mxu0 0
    %73 = vmatprep.subr.bf16.mxu0 0
    %74 = vmatpush1.bf16.xpose.msra.mxu0 0
    %75 = vmatprep.subr.bf16.mxu0 0
    %76 = vmatpush1.bf16.xpose.msra.mxu0 0
    %77 = vmatprep.subr.bf16.mxu0 0
    %78 = vmatpush1.bf16.xpose.msra.mxu0 0
    %79 = vmatprep.subr.bf16.mxu0 0
    %80 = vmatpush1.bf16.xpose.msra.mxu0 0
    %81 = vmatprep.subr.bf16.mxu0 0
    %82 = vmatpush1.bf16.xpose.msra.mxu0 %v65
    %83 = vmatprep.subr.bf16.mxu0 0
    %84 = vmatpush2.bf16.xpose.msra.mxu0 0
    %85 = vmatprep.subr.bf16.mxu0 0
    %86 = vmatpush2.bf16.xpose.msra.mxu0 0
    %87 = vmatprep.subr.bf16.mxu0 0
    %88 = vmatpush2.bf16.xpose.msra.mxu0 0
    %89 = vmatprep.subr.bf16.mxu0 0
    %90 = vmatpush2.bf16.xpose.msra.mxu0 0
    %91 = vmatprep.subr.bf16.mxu0 0
    %92 = vmatpush2.bf16.xpose.msra.mxu0 0
    %93 = vmatprep.subr.bf16.mxu0 0
    %94 = vmatpush2.bf16.xpose.msra.mxu0 0
    %95 = vmatprep.subr.bf16.mxu0 0
    %96 = vmatpush2.bf16.xpose.msra.mxu0 0
    %97 = vmatprep.subr.bf16.mxu0 0
    %98 = vmatpush2.bf16.xpose.msra.mxu0 0
    %99 = vmatprep.mubr.bf16.mxu0 0
    %100 = vmatmul.mubr.bf16.gmra.mxu0 %v63
    %v101 = vpop.f32.mrf.mxu0
    %v102 = vadd.f32 0.0, %v101
    %v103 = vpop.f32.mrf.mxu0
    %v104 = vpop.f32.mrf.mxu0
    %v105 = vpop.f32.mrf.mxu0
    %106 = vdwg.mxu0
    %v107 = vmul.f32 %v102, 2.0
    %v108 = vmul.f32 %v107, 1.442695
    %v109 = vpow.pop %v108
    %v110 = vld [vmem:[#allocation2] sm:$0xff]
    %vm111 = vcmask 64512
    %v112 = vsel %vm111, %v109, 0.0
    %113 = vadd.xlane.f32.xlu0 %v112
    %v114 = vpop.xlane.xlu0 %113
    %v115 = vadd.f32 %v110, %v114
    %vm116 = vcmask 7168
    %117 = vst.msk [vmem:[#allocation2] sm:$0xff] %vm116, %v115
    // Predicated region
    $region34: #{tpu_custom_call.1} parent=1 // pred_check
      %p118 = pneg %p55
    $region35: #{tpu_custom_call.1} parent=1 // pred_check_branch
      %120 = sbr.rel (%p118) target = $region37
    $region36: #{tpu_custom_call.1} parent=1 // pred_region
      %v121 = vld [vmem:[#allocation2] sm:$0xff]
      %v122 = vlaneseq
      %v123 = vshrl.u32 %v122, 7
      %v124 = vlaneseq
      %v125 = vand.u32 %v124, 127
      %vm126 = vcmp.eq.s32.totalorder %v123, %v125
      %v127 = vsel %vm126, %v109, 0.0
      %v128 = vsel %vm111, %v127, 0.0
      %129 = vadd.xlane.f32.xlu0 %v128
      %v130 = vpop.xlane.xlu0 %129
      %v131 = vsub.f32 %v121, %v130
      %132 = vst.msk [vmem:[#allocation2] sm:$0xff] %vm116, %v131
    $region37: #{tpu_custom_call.1} parent=1 // pred_fallthru
      _
    %133 = vmatprep.subr.bf16.mxu0 0
    %134 = vmatpush1.bf16.xpose.msra.mxu0 0
    %135 = vmatprep.subr.bf16.mxu0 0
    %136 = vmatpush1.bf16.xpose.msra.mxu0 0
    %137 = vmatprep.subr.bf16.mxu0 0
    %138 = vmatpush1.bf16.xpose.msra.mxu0 0
    %139 = vmatprep.subr.bf16.mxu0 0
    %140 = vmatpush1.bf16.xpose.msra.mxu0 0
    %141 = vmatprep.subr.bf16.mxu0 0
    %142 = vmatpush1.bf16.xpose.msra.mxu0 0
    %143 = vmatprep.subr.bf16.mxu0 0
    %144 = vmatpush1.bf16.xpose.msra.mxu0 0
    %145 = vmatprep.subr.bf16.mxu0 0
    %146 = vmatpush1.bf16.xpose.msra.mxu0 0
    %147 = vmatprep.subr.bf16.mxu0 0
    %148 = vmatpush1.bf16.xpose.msra.mxu0 %v66
    %149 = vmatprep.subr.bf16.mxu0 0
    %150 = vmatpush2.bf16.xpose.msra.mxu0 0
    %151 = vmatprep.subr.bf16.mxu0 0
    %152 = vmatpush2.bf16.xpose.msra.mxu0 0
    %153 = vmatprep.subr.bf16.mxu0 0
    %154 = vmatpush2.bf16.xpose.msra.mxu0 0
    %155 = vmatprep.subr.bf16.mxu0 0
    %156 = vmatpush2.bf16.xpose.msra.mxu0 0
    %157 = vmatprep.subr.bf16.mxu0 0
    %158 = vmatpush2.bf16.xpose.msra.mxu0 0
    %159 = vmatprep.subr.bf16.mxu0 0
    %160 = vmatpush2.bf16.xpose.msra.mxu0 0
    %161 = vmatprep.subr.bf16.mxu0 0
    %162 = vmatpush2.bf16.xpose.msra.mxu0 0
    %163 = vmatprep.subr.bf16.mxu0 0
    %164 = vmatpush2.bf16.xpose.msra.mxu0 0
    %165 = vmatprep.mubr.bf16.mxu0 0
    %166 = vmatmul.mubr.bf16.gmra.mxu0 %v63
    %v167 = vpop.f32.mrf.mxu0
    %v168 = vadd.f32 0.0, %v167
    %v169 = vpop.f32.mrf.mxu0
    %v170 = vpop.f32.mrf.mxu0
    %v171 = vpop.f32.mrf.mxu0
    %172 = vdwg.mxu0
    %v173 = vmul.f32 %v168, 2.0
    %v174 = vmul.f32 %v173, 1.442695
    %v175 = vpow.pop %v174
    %v176 = vld [vmem:[#allocation2] sm:$0xff]
    %v177 = vsel %vm111, %v175, 0.0
    %178 = vadd.xlane.f32.xlu0 %v177
    %v179 = vpop.xlane.xlu0 %178
    %v180 = vadd.f32 %v176, %v179
    %181 = vst.msk [vmem:[#allocation2] sm:$0xff] %vm116, %v180
    // Predicated region
    $region38: #{tpu_custom_call.1} parent=1 // pred_check
      %p182 = pneg %p55
    $region39: #{tpu_custom_call.1} parent=1 // pred_check_branch
      %184 = sbr.rel (%p182) target = $region41
    $region40: #{tpu_custom_call.1} parent=1 // pred_region
      %v185 = vlaneseq
      %v186 = vshrl.u32 %v185, 7
      %v187 = vlaneseq
      %v188 = vand.u32 %v187, 127
      %vm189 = vcmp.eq.s32.totalorder %v186, %v188
      %v190 = vsel %vm189, %v168, 0.0
      %v191 = vsel %vm111, %v190, 0.0
      %192 = vadd.xlane.f32.xlu0 %v191
      %v193 = vpop.xlane.xlu0 %192
      %194 = vst.msk [vmem:[#allocation4] sm:$0xff] %vm116, %v193
    $region41: #{tpu_custom_call.1} parent=1 // pred_fallthru
      _
    %195 = vmatprep.subr.bf16.mxu0 0
    %196 = vmatpush1.bf16.xpose.msra.mxu0 0
    %197 = vmatprep.subr.bf16.mxu0 0
    %198 = vmatpush1.bf16.xpose.msra.mxu0 0
    %199 = vmatprep.subr.bf16.mxu0 0
    %200 = vmatpush1.bf16.xpose.msra.mxu0 0
    %201 = vmatprep.subr.bf16.mxu0 0
    %202 = vmatpush1.bf16.xpose.msra.mxu0 0
    %203 = vmatprep.subr.bf16.mxu0 0
    %204 = vmatpush1.bf16.xpose.msra.mxu0 0
    %205 = vmatprep.subr.bf16.mxu0 0
    %206 = vmatpush1.bf16.xpose.msra.mxu0 0
    %207 = vmatprep.subr.bf16.mxu0 0
    %208 = vmatpush1.bf16.xpose.msra.mxu0 0
    %209 = vmatprep.subr.bf16.mxu0 0
    %210 = vmatpush1.bf16.xpose.msra.mxu0 %v65
    %211 = vmatprep.subr.bf16.mxu0 0
    %212 = vmatpush2.bf16.xpose.msra.mxu0 0
    %213 = vmatprep.subr.bf16.mxu0 0
    %214 = vmatpush2.bf16.xpose.msra.mxu0 0
    %215 = vmatprep.subr.bf16.mxu0 0
    %216 = vmatpush2.bf16.xpose.msra.mxu0 0
    %217 = vmatprep.subr.bf16.mxu0 0
    %218 = vmatpush2.bf16.xpose.msra.mxu0 0
    %219 = vmatprep.subr.bf16.mxu0 0
    %220 = vmatpush2.bf16.xpose.msra.mxu0 0
    %221 = vmatprep.subr.bf16.mxu0 0
    %222 = vmatpush2.bf16.xpose.msra.mxu0 0
    %223 = vmatprep.subr.bf16.mxu0 0
    %224 = vmatpush2.bf16.xpose.msra.mxu0 0
    %225 = vmatprep.subr.bf16.mxu0 0
    %226 = vmatpush2.bf16.xpose.msra.mxu0 0
    %227 = vmatprep.mubr.bf16.mxu0 0
    %228 = vmatmul.mubr.bf16.gmra.mxu0 %v64
    %v229 = vpop.f32.mrf.mxu0
    %v230 = vadd.f32 0.0, %v229
    %v231 = vpop.f32.mrf.mxu0
    %v232 = vpop.f32.mrf.mxu0
    %v233 = vpop.f32.mrf.mxu0
    %234 = vdwg.mxu0
    %v235 = vmul.f32 %v230, 2.0
    %v236 = vmul.f32 %v235, 1.442695
    %v237 = vpow.pop %v236
    %v238 = vld [vmem:[#allocation3] sm:$0xff]
    %v239 = vsel %vm111, %v237, 0.0
    %240 = vadd.xlane.f32.xlu0 %v239
    %v241 = vpop.xlane.xlu0 %240
    %v242 = vadd.f32 %v238, %v241
    %243 = vst.msk [vmem:[#allocation3] sm:$0xff] %vm116, %v242
    %244 = vmatprep.subr.bf16.mxu0 0
    %245 = vmatpush1.bf16.xpose.msra.mxu0 0
    %246 = vmatprep.subr.bf16.mxu0 0
    %247 = vmatpush1.bf16.xpose.msra.mxu0 0
    %248 = vmatprep.subr.bf16.mxu0 0
    %249 = vmatpush1.bf16.xpose.msra.mxu0 0
    %250 = vmatprep.subr.bf16.mxu0 0
    %251 = vmatpush1.bf16.xpose.msra.mxu0 0
    %252 = vmatprep.subr.bf16.mxu0 0
    %253 = vmatpush1.bf16.xpose.msra.mxu0 0
    %254 = vmatprep.subr.bf16.mxu0 0
    %255 = vmatpush1.bf16.xpose.msra.mxu0 0
    %256 = vmatprep.subr.bf16.mxu0 0
    %257 = vmatpush1.bf16.xpose.msra.mxu0 0
    %258 = vmatprep.subr.bf16.mxu0 0
    %259 = vmatpush1.bf16.xpose.msra.mxu0 %v66
    %260 = vmatprep.subr.bf16.mxu0 0
    %261 = vmatpush2.bf16.xpose.msra.mxu0 0
    %262 = vmatprep.subr.bf16.mxu0 0
    %263 = vmatpush2.bf16.xpose.msra.mxu0 0
    %264 = vmatprep.subr.bf16.mxu0 0
    %265 = vmatpush2.bf16.xpose.msra.mxu0 0
    %266 = vmatprep.subr.bf16.mxu0 0
    %267 = vmatpush2.bf16.xpose.msra.mxu0 0
    %268 = vmatprep.subr.bf16.mxu0 0
    %269 = vmatpush2.bf16.xpose.msra.mxu0 0
    %270 = vmatprep.subr.bf16.mxu0 0
    %271 = vmatpush2.bf16.xpose.msra.mxu0 0
    %272 = vmatprep.subr.bf16.mxu0 0
    %273 = vmatpush2.bf16.xpose.msra.mxu0 0
    %274 = vmatprep.subr.bf16.mxu0 0
    %275 = vmatpush2.bf16.xpose.msra.mxu0 0
    %276 = vmatprep.mubr.bf16.mxu0 0
    %277 = vmatmul.mubr.bf16.gmra.mxu0 %v64
    %v278 = vpop.f32.mrf.mxu0
    %v279 = vadd.f32 0.0, %v278
    %v280 = vpop.f32.mrf.mxu0
    %v281 = vpop.f32.mrf.mxu0
    %v282 = vpop.f32.mrf.mxu0
    %283 = vdwg.mxu0
    %v284 = vmul.f32 %v279, 2.0
    %v285 = vmul.f32 %v284, 1.442695
    %v286 = vpow.pop %v285
    %v287 = vld [vmem:[#allocation3] sm:$0xff]
    %v288 = vsel %vm111, %v286, 0.0
    %289 = vadd.xlane.f32.xlu0 %v288
    %v290 = vpop.xlane.xlu0 %289
    %v291 = vadd.f32 %v287, %v290
    %292 = vst.msk [vmem:[#allocation3] sm:$0xff] %vm116, %v291
    // Predicated region
    $region42: #{tpu_custom_call.1} parent=1 // pred_check
      %p293 = pneg %p55
    $region43: #{tpu_custom_call.1} parent=1 // pred_check_branch
      %295 = sbr.rel (%p293) target = $region45
    $region44: #{tpu_custom_call.1} parent=1 // pred_region
      %v296 = vld [vmem:[#allocation3] sm:$0xff]
      %v297 = vlaneseq
      %v298 = vshrl.u32 %v297, 7
      %v299 = vlaneseq
      %v300 = vand.u32 %v299, 127
      %vm301 = vcmp.eq.s32.totalorder %v298, %v300
      %v302 = vsel %vm301, %v286, 0.0
      %v303 = vsel %vm111, %v302, 0.0
      %304 = vadd.xlane.f32.xlu0 %v303
      %v305 = vpop.xlane.xlu0 %304
      %v306 = vsub.f32 %v296, %v305
      %307 = vst.msk [vmem:[#allocation3] sm:$0xff] %vm116, %v306
    $region45: #{tpu_custom_call.1} parent=1 // pred_fallthru
      _
    // Predicated region
    $region46: #{tpu_custom_call.1} parent=1 // pred_check
      %p308 = pneg %p56
    $region47: #{tpu_custom_call.1} parent=1 // pred_check_branch
      %310 = sbr.rel (%p308) target = $region49
    $region48: #{tpu_custom_call.1} parent=1 // pred_region
      %v311 = vld [vmem:[#allocation2] sm:$0xff]
      %v312 = vld [vmem:[#allocation3] sm:$0xff]
      %v313 = vld [vmem:[#allocation4] sm:$0xff]
      %v314 = vmul.f32 %v313, 2.0
      %v315 = vlog2.pop %v311
      %v316 = vmul.f32 %v315, 0.6931472
      %v317 = vsub.f32 %v316, %v314
      %v318 = vlog2.pop %v312
      %v319 = vmul.f32 %v318, 0.6931472
      %v320 = vsub.f32 %v319, %v314
      %321 = vst.msk [vmem:[%s4] sm:$0xff] %vm116, %v317
      %322 = vst.msk [vmem:[%s5] sm:$0xff] %vm116, %v320
    $region49: #{tpu_custom_call.1} parent=1 // pred_fallthru
      _
    // Predicated region
    $region50: #{tpu_custom_call.1} parent=1 // pred_check
      _
    $region51: #{tpu_custom_call.1} parent=1 // pred_check_branch
      %324 = sbr.rel (0) target = $region53
    $region52: #{tpu_custom_call.1} parent=1 // pred_region
      _
    $region53: #{tpu_custom_call.1} parent=1 // pred_fallthru
      _
    // Predicated region
    $region54: #{tpu_custom_call.1} parent=1 // pred_check
      _
    $region55: #{tpu_custom_call.1} parent=1 // pred_check_branch
      %326 = sbr.rel (0) target = $region57
    $region56: #{tpu_custom_call.1} parent=1 // pred_region
      _
    $region57: #{tpu_custom_call.1} parent=1 // pred_fallthru
      _
    // Predicated region
    $region58: #{tpu_custom_call.1} parent=1 // pred_check
      _
    $region59: #{tpu_custom_call.1} parent=1 // pred_check_branch
      %328 = sbr.rel (0) target = $region61
    $region60: #{tpu_custom_call.1} parent=1 // pred_region
      _
    $region61: #{tpu_custom_call.1} parent=1 // pred_fallthru
      _
    // Predicated region
    $region62: #{tpu_custom_call.1} parent=1 // pred_check
      _
    $region63: #{tpu_custom_call.1} parent=1 // pred_check_branch
      %330 = sbr.rel (0) target = $region65
    $region64: #{tpu_custom_call.1} parent=1 // pred_region
      _
    $region65: #{tpu_custom_call.1} parent=1 // pred_fallthru
      _
    %331 = vsyncpa [#allocation6], 1
    %332 = vsyncpa [#allocation8], 1

</llo_original>
